<compile_context>
chip_gen: v6e
topology: v6e:2x2x1
jax: 0.10.0
libtpu: 0.0.40
codegen_flags: <defaults>
</compile_context>

<pallas_src>
import functools
import math

import jax
import jax.numpy as jnp
from jax import lax
from jax.experimental import pallas as pl
from jax.experimental.pallas import tpu as pltpu

_EPS = 1e-12          # F.normalize default eps (clamp applied to the norm)
_EPS2 = _EPS * _EPS   # equivalent clamp applied to the sum of squares


# ----------------------------------------------------------------------------- kernel
def _cosine_linear_kernel(sigma_ref, x_ref, w_ref, invw_ref, o_ref, *,
                          reduce_active, apply_sigma):
    # Contract the last dim of both operands (trans-B form, no XLU transpose).
    dims = (((1,), (1,)), ((), ()))

    x = x_ref[...]                                            # (TB, F), input dtype
    xf = x.astype(jnp.float32)
    inv_x = lax.rsqrt(
        jnp.maximum(jnp.sum(xf * xf, axis=-1, keepdims=True), _EPS2))      # (TB, 1)
    # rsqrt(max(ss, eps^2)) == 1/max(sqrt(ss), eps) -> exact F.normalize clamp.

    def sim(p):
        raw = lax.dot_general(x, w_ref[p], dimension_numbers=dims,
                              preferred_element_type=jnp.float32)           # (TB, TC)
        return raw * inv_x * invw_ref[p]                      # cosine similarity

    p_count = w_ref.shape[0]                                  # static (1 or nb_proxy)

    if reduce_active and p_count > 1:
        # Online softmax-weighted sum over the proxy axis: only m/num/den stay
        # live (not all p_count similarity tiles), keeping vreg pressure flat.
        s = sim(0)
        m = s
        num = s                                               # exp(0) * s
        den = jnp.ones_like(s)
        for p in range(1, p_count):                           # small static unroll
            s = sim(p)
            m_new = jnp.maximum(m, s)
            a = jnp.exp(m - m_new)
            e = jnp.exp(s - m_new)
            num = a * num + e * s
            den = a * den + e
            m = m_new
        out = num / den                                       # (TB, TC)
    else:
        out = sim(0)                                          # p_count == 1 here

    if apply_sigma:
        out = out * sigma_ref[0]                              # fused sigma scale

    o_ref[...] = out.astype(o_ref.dtype)


# ----------------------------------------------------------------------------- helpers
def _round_up(n, m):
    return ((n + m - 1) // m) * m


def _vmem_capacity_bytes():
    try:
        return int(pltpu.get_tpu_info().vmem_capacity_bytes)
    except Exception:
        pass
    try:
        kind = jax.devices()[0].device_kind.lower()
        if "v7" not in kind:
            return 128 << 20           # v5e / v6e class parts
    except Exception:
        pass
    return 64 << 20                    # conservative (v7x per-TensorCore VMEM)


def _largest_tile_c(total, cap):
    """Largest divisor of `total` that is a multiple of 128 and <= cap."""
    best, t = 128, 128
    while t <= total:
        if total % t == 0 and t <= cap:
            best = t
        t += 128
    return best


def _vmem_needed(tile_b, tile_c, f_in, p_count, x_item, w_item, o_item,
                 reduce_active):
    # double-buffered pipeline blocks
    io = 2 * (tile_b * f_in * x_item
              + p_count * tile_c * f_in * w_item
              + p_count * tile_c * 4
              + tile_b * tile_c * o_item)
    # in-kernel f32 temporaries: xf copy + live similarity / softmax tiles
    live_tiles = 5 if reduce_active else 2
    tmp = tile_b * f_in * 4 + live_tiles * tile_b * tile_c * 4
    return io + tmp + (8 << 20)        # + margin for Mosaic internal scratch


# ----------------------------------------------------------------------------- wrapper
def cosine_linear(x, weight, sigma=None, *, nb_proxy=1, to_reduce=False,
                  training=False):
    """Pallas TPU implementation of CosineLinear.forward."""
    if isinstance(x, dict):                       # module accepts {'features': ...}
        x = x['features']
    b, f_in = x.shape
    cp, f_w = weight.shape
    assert f_in == f_w, (f_in, f_w)
    assert cp % nb_proxy == 0, "weight rows must be out_features * nb_proxy"

    reduce_active = bool(to_reduce) and nb_proxy > 1
    # TODO(synk): in a stateful module, cache w_packed / inv_w / the class pad with
    # the parameter and rebuild only when the weight changes (the repack + norm here
    # is an extra HBM pass over the weight every forward otherwise).
    if reduce_active:
        nc = cp // nb_proxy
        # class-major rows (c*nb_proxy + p) -> proxy-major (nb_proxy, nb_classes, F)
        w_packed = jnp.transpose(weight.reshape(nc, nb_proxy, f_in), (1, 0, 2))
        out_dim, p_count = nc, nb_proxy
    else:
        w_packed = weight.reshape(1, cp, f_in)    # metadata-only reshape
        out_dim, p_count = cp, 1

    apply_sigma = (sigma is not None) and training
    sigma_arr = jnp.reshape(
        jnp.asarray(1.0 if sigma is None else sigma, dtype=jnp.float32), (1,))

    out_dtype = x.dtype
    x_item = jnp.dtype(x.dtype).itemsize
    w_item = jnp.dtype(weight.dtype).itemsize
    o_item = jnp.dtype(out_dtype).itemsize

    # ---- padding: lane-dense classes (multiple of 128 -> unmasked stores),
    #               sublane-aligned batch (16 for packed dtypes) ---------------
    b_align = 16 if x_item < 4 else 8
    b_pad = _round_up(b, b_align)
    out_padded = _round_up(out_dim, 128)
    if b_pad != b:
        x = jnp.pad(x, ((0, b_pad - b), (0, 0)))
    if out_padded != out_dim:
        w_packed = jnp.pad(w_packed, ((0, 0), (0, out_padded - out_dim), (0, 0)))

    # Per-class inverse weight norms, computed once outside the kernel (f32,
    # lane-dense (p, 1, C)); the kernel never makes an f32 copy of the weight.
    wf = w_packed.astype(jnp.float32)
    inv_w = (1.0 / jnp.maximum(jnp.sqrt(jnp.sum(wf * wf, axis=-1)), _EPS)
             ).reshape(p_count, 1, out_padded)

    # ---- per-generation VMEM budgets & tiling ---------------------------------
    vmem_cap = _vmem_capacity_bytes()
    if vmem_cap >= (96 << 20):        # v5e / v6e: 128 MiB VMEM per core
        vmem_budget = 100 << 20
        w_block_cap = 40 << 20        # double-buffered weight-stream budget
    else:                             # v7x: 64 MiB per TensorCore
        vmem_budget = 52 << 20
        w_block_cap = 14 << 20

    # Batch tile: keep x fully resident when small (its block index then never
    # changes, so it is DMA'd once and never reloaded per class tile).
    if 2 * b_pad * f_in * x_item <= vmem_budget // 4:
        tile_b = b_pad
    else:
        tile_b = next(t for t in (512, 256, 128, 64, 32, 16, 8) if b_pad % t == 0)

    tile_c_cap = max(128, w_block_cap // max(1, 2 * p_count * f_in * w_item))
    tile_c = _largest_tile_c(out_padded, tile_c_cap)

    # Shrink tiles if the full estimate (incl. f32 temporaries) overflows budget.
    while (_vmem_needed(tile_b, tile_c, f_in, p_count, x_item, w_item, o_item,
                        reduce_active) > vmem_budget and tile_c > 128):
        tile_c = _largest_tile_c(out_padded, tile_c - 128)
    while (_vmem_needed(tile_b, tile_c, f_in, p_count, x_item, w_item, o_item,
                        reduce_active) > vmem_budget and tile_b > 8):
        cands = [t for t in (512, 256, 128, 64, 32, 16, 8)
                 if t < tile_b and b_pad % t == 0]
        if not cands:
            break
        tile_b = cands[0]

    needed = _vmem_needed(tile_b, tile_c, f_in, p_count, x_item, w_item, o_item,
                          reduce_active)
    vmem_limit = int(min(vmem_budget, max(32 << 20, needed)))

    # classes outer / batch inner: the weight tile (the large stream) is DMA'd
    # exactly once and stays resident across all batch steps.
    grid = (out_padded // tile_c, b_pad // tile_b)

    kernel = functools.partial(_cosine_linear_kernel,
                               reduce_active=reduce_active,
                               apply_sigma=apply_sigma)

    out = pl.pallas_call(
        kernel,
        out_shape=jax.ShapeDtypeStruct((b_pad, out_padded), out_dtype),
        grid=grid,
        in_specs=[
            pl.BlockSpec(memory_space=pltpu.MemorySpace.SMEM),            # sigma
            pl.BlockSpec((tile_b, f_in), lambda cj, bi: (bi, 0)),         # x tile
            pl.BlockSpec((p_count, tile_c, f_in),
                         lambda cj, bi: (0, cj, 0)),                      # weight
            pl.BlockSpec((p_count, 1, tile_c),
                         lambda cj, bi: (0, 0, cj)),                      # 1/||w||
        ],
        out_specs=pl.BlockSpec((tile_b, tile_c), lambda cj, bi: (bi, cj)),
        compiler_params=pltpu.CompilerParams(
            # Megacore shards only the class axis; batch stays on one core so the
            # weight stream is read exactly once per chip.
            dimension_semantics=("parallel", "arbitrary"),
            vmem_limit_bytes=vmem_limit),
    )(sigma_arr, x, w_packed, inv_w)

    if b_pad != b or out_padded != out_dim:
        out = out[:b, :out_dim]
    return out


# ----------------------------------------------------------------------------- reference
def _reference(x, weight, sigma, *, nb_proxy, to_reduce, training):
    """Pure-JAX mirror of the PyTorch module forward."""
    xf = x.astype(jnp.float32)
    wf = weight.astype(jnp.float32)
    xn = xf / jnp.maximum(jnp.linalg.norm(xf, axis=1, keepdims=True), _EPS)
    wn = wf / jnp.maximum(jnp.linalg.norm(wf, axis=1, keepdims=True), _EPS)
    out = jnp.matmul(xn, wn.T, precision=lax.Precision.HIGHEST)
    if to_reduce and nb_proxy > 1:
        bs, cpd = out.shape
        nc = cpd // nb_proxy
        simi = out.reshape(bs, nc, nb_proxy)
        att = jax.nn.softmax(simi, axis=-1)
        out = jnp.sum(att * simi, axis=-1)
    if sigma is not None and training:
        out = jnp.asarray(sigma, jnp.float32) * out
    return out


if __name__ == "__main__":
    key = jax.random.PRNGKey(0)
    k1, k2, k3, k4 = jax.random.split(key, 4)

    # --- Case A: proxy-reduced eval-mode head (to_reduce=True, nb_proxy=2) ----
    #     exercises class padding 10 -> 128 and the online proxy softmax.
    bA, fA, clsA, npxA = 8, 64, 10, 2
    xA = jax.random.normal(k1, (bA, fA), dtype=jnp.float32)
    stdvA = 1.0 / math.sqrt(fA)                   # reset_parameters(): U(-stdv, stdv)
    wA = jax.random.uniform(k2, (clsA * npxA, fA), minval=-stdvA, maxval=stdvA,
                            dtype=jnp.float32)
    sigmaA = jnp.array(1.0, dtype=jnp.float32)    # reset_parameters(): sigma = 1
    outA = jax.block_until_ready(
        cosine_linear(xA, wA, sigmaA, nb_proxy=npxA, to_reduce=True,
                      training=False))
    refA = _reference(xA, wA, sigmaA, nb_proxy=npxA, to_reduce=True,
                      training=False)
    assert outA.shape == (bA, clsA), outA.shape
    assert jnp.allclose(outA, refA, atol=1e-4, rtol=1e-4), \
        float(jnp.max(jnp.abs(outA - refA)))

    # --- Case B: raw cosine head, training mode (sigma fused) -----------------
    bB, fB, clsB = 16, 128, 384
    xB = jax.random.normal(k3, (bB, fB), dtype=jnp.float32)
    stdvB = 1.0 / math.sqrt(fB)
    wB = jax.random.uniform(k4, (clsB, fB), minval=-stdvB, maxval=stdvB,
                            dtype=jnp.float32)
    sigmaB = jnp.array(1.7, dtype=jnp.float32)
    outB = jax.block_until_ready(
        cosine_linear(xB, wB, sigmaB, nb_proxy=1, to_reduce=False,
                      training=True))
    refB = _reference(xB, wB, sigmaB, nb_proxy=1, to_reduce=False,
                      training=True)
    assert outB.shape == (bB, clsB), outB.shape
    assert jnp.allclose(outB, refB, atol=1e-4, rtol=1e-4), \
        float(jnp.max(jnp.abs(outB - refB)))

    print("KERNEL_OK")
</pallas_src>

<mosaic_0001>
module attributes {stable_mosaic.version = 11 : i64} {
  func.func @_cosine_linear_kernel(%arg0: i32, %arg1: i32, %arg2: memref<1xf32, #tpu.memory_space<smem>>, %arg3: memref<8x64xf32, #tpu.memory_space<vmem>>, %arg4: memref<2x128x64xf32, #tpu.memory_space<vmem>>, %arg5: memref<2x1x128xf32, #tpu.memory_space<vmem>>, %arg6: memref<8x128xf32, #tpu.memory_space<vmem>>) attributes {dimension_semantics = [#tpu.dimension_semantics<parallel>, #tpu.dimension_semantics<arbitrary>], iteration_bounds = array<i64: 1, 1>, scalar_prefetch = 0 : i64, scratch_operands = 0 : i64, tpu.core_type = #tpu.core_type<tc>, window_params = [{transform_indices = @transform_0, window_bounds = array<i64: 1>}, {transform_indices = @transform_1, window_bounds = array<i64: 8, 64>}, {transform_indices = @transform_2, window_bounds = array<i64: 2, 128, 64>}, {transform_indices = @transform_3, window_bounds = array<i64: 2, 1, 128>}, {transform_indices = @transform_4, window_bounds = array<i64: 8, 128>}]} {
    %c0 = arith.constant 0 : index
    %c0_0 = arith.constant 0 : index
    %0 = vector.load %arg3[%c0, %c0_0] : memref<8x64xf32, #tpu.memory_space<vmem>>, vector<8x64xf32>
    %1 = arith.mulf %0, %0 : vector<8x64xf32>
    %cst = arith.constant dense<0.000000e+00> : vector<8xf32>
    %2 = vector.multi_reduction <add>, %1, %cst [1] : vector<8x64xf32> to vector<8xf32>
    %3 = vector.shape_cast %2 : vector<8xf32> to vector<8x1xf32>
    %cst_1 = arith.constant 1.000000e-24 : f32
    %4 = vector.broadcast %cst_1 : f32 to vector<8x1xf32>
    %5 = arith.maximumf %3, %4 : vector<8x1xf32>
    %6 = math.rsqrt %5 : vector<8x1xf32>
    %c0_2 = arith.constant 0 : index
    %c0_3 = arith.constant 0 : index
    %c0_4 = arith.constant 0 : index
    %7 = vector.load %arg4[%c0_2, %c0_3, %c0_4] : memref<2x128x64xf32, #tpu.memory_space<vmem>>, vector<1x128x64xf32>
    %8 = vector.shape_cast %7 : vector<1x128x64xf32> to vector<128x64xf32>
    %cst_5 = arith.constant dense<0.000000e+00> : vector<8x128xf32>
    %9 = tpu.matmul %0, %8, %cst_5 {dimension_numbers = #tpu.dot_dimension_numbers<[1], [1], [0], [0], [0, 0, 1, 0], [], []>} : vector<8x64xf32>, vector<128x64xf32>, vector<8x128xf32> -> vector<8x128xf32>
    %10 = vector.broadcast %6 : vector<8x1xf32> to vector<8x128xf32>
    %11 = arith.mulf %9, %10 : vector<8x128xf32>
    %c0_6 = arith.constant 0 : index
    %c0_7 = arith.constant 0 : index
    %c0_8 = arith.constant 0 : index
    %12 = vector.load %arg5[%c0_6, %c0_7, %c0_8] : memref<2x1x128xf32, #tpu.memory_space<vmem>>, vector<1x1x128xf32>
    %13 = vector.shape_cast %12 : vector<1x1x128xf32> to vector<1x128xf32>
    %14 = vector.broadcast %13 : vector<1x128xf32> to vector<8x128xf32>
    %15 = arith.mulf %11, %14 : vector<8x128xf32>
    %cst_9 = arith.constant 1.000000e+00 : f32
    %16 = vector.broadcast %cst_9 : f32 to vector<8x128xf32>
    %c1 = arith.constant 1 : index
    %c0_10 = arith.constant 0 : index
    %c0_11 = arith.constant 0 : index
    %17 = vector.load %arg4[%c1, %c0_10, %c0_11] : memref<2x128x64xf32, #tpu.memory_space<vmem>>, vector<1x128x64xf32>
    %18 = vector.shape_cast %17 : vector<1x128x64xf32> to vector<128x64xf32>
    %cst_12 = arith.constant dense<0.000000e+00> : vector<8x128xf32>
    %19 = tpu.matmul %0, %18, %cst_12 {dimension_numbers = #tpu.dot_dimension_numbers<[1], [1], [0], [0], [0, 0, 1, 0], [], []>} : vector<8x64xf32>, vector<128x64xf32>, vector<8x128xf32> -> vector<8x128xf32>
    %20 = vector.broadcast %6 : vector<8x1xf32> to vector<8x128xf32>
    %21 = arith.mulf %19, %20 : vector<8x128xf32>
    %c1_13 = arith.constant 1 : index
    %c0_14 = arith.constant 0 : index
    %c0_15 = arith.constant 0 : index
    %22 = vector.load %arg5[%c1_13, %c0_14, %c0_15] : memref<2x1x128xf32, #tpu.memory_space<vmem>>, vector<1x1x128xf32>
    %23 = vector.shape_cast %22 : vector<1x1x128xf32> to vector<1x128xf32>
    %24 = vector.broadcast %23 : vector<1x128xf32> to vector<8x128xf32>
    %25 = arith.mulf %21, %24 : vector<8x128xf32>
    %26 = arith.maximumf %15, %25 : vector<8x128xf32>
    %27 = arith.subf %15, %26 : vector<8x128xf32>
    %28 = math.exp %27 : vector<8x128xf32>
    %29 = arith.subf %25, %26 : vector<8x128xf32>
    %30 = math.exp %29 : vector<8x128xf32>
    %31 = arith.mulf %28, %15 : vector<8x128xf32>
    %32 = arith.mulf %30, %25 : vector<8x128xf32>
    %33 = arith.addf %31, %32 : vector<8x128xf32>
    %34 = arith.mulf %28, %16 : vector<8x128xf32>
    %35 = arith.addf %34, %30 : vector<8x128xf32>
    %36 = arith.divf %33, %35 : vector<8x128xf32>
    %c0_16 = arith.constant 0 : index
    %c0_17 = arith.constant 0 : index
    %37 = vector.load %arg6[%c0_16, %c0_17] : memref<8x128xf32, #tpu.memory_space<vmem>>, vector<8x128xf32>
    tpu.vector_store %arg6[%c0_16, %c0_17], %36 {strides = array<i32>} : memref<8x128xf32, #tpu.memory_space<vmem>>, vector<8x128xf32>,
    return
  }
  func.func @transform_0(%arg0: i32, %arg1: i32) -> i32 {
    %c0_i32 = arith.constant 0 : i32
    %c0_i32_0 = arith.constant 0 : i32
    return %c0_i32 : i32
  }
  func.func @transform_1(%arg0: i32, %arg1: i32) -> (i32, i32) {
    %c0_i32 = arith.constant 0 : i32
    %c0_i32_0 = arith.constant 0 : i32
    return %arg1, %c0_i32 : i32, i32
  }
  func.func @transform_2(%arg0: i32, %arg1: i32) -> (i32, i32, i32) {
    %c0_i32 = arith.constant 0 : i32
    %c0_i32_0 = arith.constant 0 : i32
    %c0_i32_1 = arith.constant 0 : i32
    return %c0_i32, %arg0, %c0_i32_0 : i32, i32, i32
  }
  func.func @transform_3(%arg0: i32, %arg1: i32) -> (i32, i32, i32) {
    %c0_i32 = arith.constant 0 : i32
    %c0_i32_0 = arith.constant 0 : i32
    %c0_i32_1 = arith.constant 0 : i32
    return %c0_i32, %c0_i32_0, %arg0 : i32, i32, i32
  }
  func.func @transform_4(%arg0: i32, %arg1: i32) -> (i32, i32) {
    %c0_i32 = arith.constant 0 : i32
    return %arg1, %arg0 : i32, i32
  }
}

</mosaic_0001>

<llo_original>
// kernel: tpu_custom_call.1
$region0: #{tpu_custom_call.1}
  #allocation0 [shape = 'u32[]', space=smem, size = 0x4, offset = 0x4, fixed_abs, tag = 'smem constant byte address 0x4 - core index']
  #allocation1 [shape = 'u32[144,128]{1,0:T(1,128)}', space=vmem, size = 0x12000, scoped, tag = 'internal scratch']
  #allocation2 [shape = 'f32[1]{0:T(128)S(6)}', space=smem, size = 0x200, scoped, tag = 'scoped memory for tpu_custom_call.1']
  %s0 = inlined_call_operand.<no memory space> [shape: f32[1], index: 0, kind: input, shape index: {}]
  %s1 = inlined_call_operand.vmem [shape: f32[8,64], index: 1, kind: input, shape index: {}]
  %s2 = inlined_call_operand.vmem [shape: f32[2,128,64], index: 2, kind: input, shape index: {}]
  %s3 = inlined_call_operand.vmem [shape: f32[2,1,128], index: 3, kind: input, shape index: {}]
  %s4 = inlined_call_operand.hbm [shape: f32[8,128], index: 4, kind: output, shape index: {}]
  %s5 = sld [smem:[#allocation0]]
  $region26: #{tpu_custom_call.1} parent=0
    _
  %s7 = ssub.s32 1, %s5
  %s8 = scalar_select 0, %s7, %s5
  %9 = sst [smem:[#allocation2]] %s0
  $region1: #{tpu_custom_call.1} parent=0
    #allocation3 [shape = 'u8[4096]{0}', space=vmem, size = 0x1000, scoped, tag = 'output window, operand 0, single buffered']
    #allocation4 [shape = 's32[1]{0}', space=sflag, size = 0x4, scoped, tag = 'scoped memory for tpu_custom_call.1']
    %10 = vsyncpa [#allocation4], 0
    // Predicated region
    $region2: #{tpu_custom_call.1} parent=1 // pred_check
      _
    $region3: #{tpu_custom_call.1} parent=1 // pred_check_branch
      %12 = sbr.rel (0) target = $region5
    $region4: #{tpu_custom_call.1} parent=1 // pred_region
      _
    $region5: #{tpu_custom_call.1} parent=1 // pred_fallthru
      _
    // Predicated region
    $region6: #{tpu_custom_call.1} parent=1 // pred_check
      _
    $region7: #{tpu_custom_call.1} parent=1 // pred_check_branch
      %14 = sbr.rel (0) target = $region9
    $region8: #{tpu_custom_call.1} parent=1 // pred_region
      _
    $region9: #{tpu_custom_call.1} parent=1 // pred_fallthru
      _
    // Predicated region
    $region10: #{tpu_custom_call.1} parent=1 // pred_check
      _
    $region11: #{tpu_custom_call.1} parent=1 // pred_check_branch
      %16 = sbr.rel (0) target = $region13
    $region12: #{tpu_custom_call.1} parent=1 // pred_region
      _
    $region13: #{tpu_custom_call.1} parent=1 // pred_fallthru
      _
    // Predicated region
    $region14: #{tpu_custom_call.1} parent=1 // pred_check
      _
    $region15: #{tpu_custom_call.1} parent=1 // pred_check_branch
      %18 = sbr.rel (0) target = $region17
    $region16: #{tpu_custom_call.1} parent=1 // pred_region
      _
    $region17: #{tpu_custom_call.1} parent=1 // pred_fallthru
      _
    %v19 = vld [vmem:[%s1] sm:$0xff]
    %v20 = vmul.f32 %v19, %v19
    %vm21 = vcmask 523264
    %v22 = vsel %vm21, %v20, 0.0
    %23 = vadd.xlane.f32.xlu0 %v22
    %v24 = vpop.xlane.xlu0 %23
    %v25 = vmax.f32 %v24, 1e-24
    %v26 = vrsqrt.pop %v25
    %v27 = vld [vmem:[%s2] sm:$0xff]
    %v28 = vld [vmem:[%s2 + $0x8] sm:$0xff]
    %v29 = vld [vmem:[%s2 + $0x10] sm:$0xff]
    %v30 = vld [vmem:[%s2 + $0x18] sm:$0xff]
    %v31 = vld [vmem:[%s2 + $0x20] sm:$0xff]
    %v32 = vld [vmem:[%s2 + $0x28] sm:$0xff]
    %v33 = vld [vmem:[%s2 + $0x30] sm:$0xff]
    %v34 = vld [vmem:[%s2 + $0x38] sm:$0xff]
    %v35 = vld [vmem:[%s2 + $0x40] sm:$0xff]
    %v36 = vld [vmem:[%s2 + $0x48] sm:$0xff]
    %v37 = vld [vmem:[%s2 + $0x50] sm:$0xff]
    %v38 = vld [vmem:[%s2 + $0x58] sm:$0xff]
    %v39 = vld [vmem:[%s2 + $0x60] sm:$0xff]
    %v40 = vld [vmem:[%s2 + $0x68] sm:$0xff]
    %v41 = vld [vmem:[%s2 + $0x70] sm:$0xff]
    %v42 = vld [vmem:[%s2 + $0x78] sm:$0xff]
    %v44 = vsel %vm21, %v19, 0
    %v47 = vsel %vm21, %v27, 0
    %v50 = vsel %vm21, %v28, 0
    %v53 = vsel %vm21, %v29, 0
    %v56 = vsel %vm21, %v30, 0
    %v59 = vsel %vm21, %v31, 0
    %v62 = vsel %vm21, %v32, 0
    %v65 = vsel %vm21, %v33, 0
    %v68 = vsel %vm21, %v34, 0
    %v71 = vsel %vm21, %v35, 0
    %v74 = vsel %vm21, %v36, 0
    %v77 = vsel %vm21, %v37, 0
    %v80 = vsel %vm21, %v38, 0
    %v83 = vsel %vm21, %v39, 0
    %v86 = vsel %vm21, %v40, 0
    %v89 = vsel %vm21, %v41, 0
    %v92 = vsel %vm21, %v42, 0
    %94 = vmatprep.subr.mxu0 0.0
    %95 = vmatpush1.xpose.msra.mxu0 %v92
    %96 = vmatprep.subr.mxu0 0.0
    %97 = vmatpush1.xpose.msra.mxu0 %v89
    %98 = vmatprep.subr.mxu0 0.0
    %99 = vmatpush1.xpose.msra.mxu0 %v86
    %100 = vmatprep.subr.mxu0 0.0
    %101 = vmatpush1.xpose.msra.mxu0 %v83
    %102 = vmatprep.subr.mxu0 0.0
    %103 = vmatpush1.xpose.msra.mxu0 %v80
    %104 = vmatprep.subr.mxu0 0.0
    %105 = vmatpush1.xpose.msra.mxu0 %v77
    %106 = vmatprep.subr.mxu0 0.0
    %107 = vmatpush1.xpose.msra.mxu0 %v74
    %108 = vmatprep.subr.mxu0 0.0
    %109 = vmatpush1.xpose.msra.mxu0 %v71
    %110 = vmatprep.subr.mxu0 0.0
    %111 = vmatpush1.xpose.msra.mxu0 %v68
    %112 = vmatprep.subr.mxu0 0.0
    %113 = vmatpush1.xpose.msra.mxu0 %v65
    %114 = vmatprep.subr.mxu0 0.0
    %115 = vmatpush1.xpose.msra.mxu0 %v62
    %116 = vmatprep.subr.mxu0 0.0
    %117 = vmatpush1.xpose.msra.mxu0 %v59
    %118 = vmatprep.subr.mxu0 0.0
    %119 = vmatpush1.xpose.msra.mxu0 %v56
    %120 = vmatprep.subr.mxu0 0.0
    %121 = vmatpush1.xpose.msra.mxu0 %v53
    %122 = vmatprep.subr.mxu0 0.0
    %123 = vmatpush1.xpose.msra.mxu0 %v50
    %124 = vmatprep.subr.mxu0 0.0
    %125 = vmatpush1.xpose.msra.mxu0 %v47
    %126 = vmatprep.subr.mxu0 0.0
    %127 = vmatpush2.xpose.msra.mxu0 0.0
    %128 = vmatprep.subr.mxu0 0.0
    %129 = vmatpush2.xpose.msra.mxu0 0.0
    %130 = vmatprep.subr.mxu0 0.0
    %131 = vmatpush2.xpose.msra.mxu0 0.0
    %132 = vmatprep.subr.mxu0 0.0
    %133 = vmatpush2.xpose.msra.mxu0 0.0
    %134 = vmatprep.subr.mxu0 0.0
    %135 = vmatpush2.xpose.msra.mxu0 0.0
    %136 = vmatprep.subr.mxu0 0.0
    %137 = vmatpush2.xpose.msra.mxu0 0.0
    %138 = vmatprep.subr.mxu0 0.0
    %139 = vmatpush2.xpose.msra.mxu0 0.0
    %140 = vmatprep.subr.mxu0 0.0
    %141 = vmatpush2.xpose.msra.mxu0 0.0
    %142 = vmatprep.subr.mxu0 0.0
    %143 = vmatpush2.xpose.msra.mxu0 0.0
    %144 = vmatprep.subr.mxu0 0.0
    %145 = vmatpush2.xpose.msra.mxu0 0.0
    %146 = vmatprep.subr.mxu0 0.0
    %147 = vmatpush2.xpose.msra.mxu0 0.0
    %148 = vmatprep.subr.mxu0 0.0
    %149 = vmatpush2.xpose.msra.mxu0 0.0
    %150 = vmatprep.subr.mxu0 0.0
    %151 = vmatpush2.xpose.msra.mxu0 0.0
    %152 = vmatprep.subr.mxu0 0.0
    %153 = vmatpush2.xpose.msra.mxu0 0.0
    %154 = vmatprep.subr.mxu0 0.0
    %155 = vmatpush2.xpose.msra.mxu0 0.0
    %156 = vmatprep.subr.mxu0 0.0
    %157 = vmatpush2.xpose.msra.mxu0 0.0
    %158 = vmatprep.mubr.f32.mxu0 0.0
    %159 = vmatmul.mubr.f32.gmra.mxu0 %v44
    %v160 = vpop.f32.mrf.mxu0
    %v161 = vadd.f32 0.0, %v160
    %v162 = vpop.f32.mrf.mxu0
    %163 = vdwg.mxu0
    %v164 = vmul.f32 %v161, %v26
    %v165 = vld [vmem:[%s3] sm:$0x1]
    %v167 = vlaneseq
    %v168 = vshrl.u32 %v167, 7
    %v169 = vsub.s32 0, %v168
    %v170 = vrot.slane %v165, %v169
    %v172 = vmul.f32 %v164, %v170
    %s173 = scalar_lea.vmem %s2, 128
    %v174 = vld [vmem:[%s173] sm:$0xff]
    %v175 = vld [vmem:[%s173 + $0x8] sm:$0xff]
    %v176 = vld [vmem:[%s173 + $0x10] sm:$0xff]
    %v177 = vld [vmem:[%s173 + $0x18] sm:$0xff]
    %v178 = vld [vmem:[%s173 + $0x20] sm:$0xff]
    %v179 = vld [vmem:[%s173 + $0x28] sm:$0xff]
    %v180 = vld [vmem:[%s173 + $0x30] sm:$0xff]
    %v181 = vld [vmem:[%s173 + $0x38] sm:$0xff]
    %v182 = vld [vmem:[%s173 + $0x40] sm:$0xff]
    %v183 = vld [vmem:[%s173 + $0x48] sm:$0xff]
    %v184 = vld [vmem:[%s173 + $0x50] sm:$0xff]
    %v185 = vld [vmem:[%s173 + $0x58] sm:$0xff]
    %v186 = vld [vmem:[%s173 + $0x60] sm:$0xff]
    %v187 = vld [vmem:[%s173 + $0x68] sm:$0xff]
    %v188 = vld [vmem:[%s173 + $0x70] sm:$0xff]
    %v189 = vld [vmem:[%s173 + $0x78] sm:$0xff]
    %v191 = vsel %vm21, %v174, 0
    %v194 = vsel %vm21, %v175, 0
    %v197 = vsel %vm21, %v176, 0
    %v200 = vsel %vm21, %v177, 0
    %v203 = vsel %vm21, %v178, 0
    %v206 = vsel %vm21, %v179, 0
    %v209 = vsel %vm21, %v180, 0
    %v212 = vsel %vm21, %v181, 0
    %v215 = vsel %vm21, %v182, 0
    %v218 = vsel %vm21, %v183, 0
    %v221 = vsel %vm21, %v184, 0
    %v224 = vsel %vm21, %v185, 0
    %v227 = vsel %vm21, %v186, 0
    %v230 = vsel %vm21, %v187, 0
    %v233 = vsel %vm21, %v188, 0
    %v236 = vsel %vm21, %v189, 0
    %238 = vmatprep.subr.mxu0 0.0
    %239 = vmatpush1.xpose.msra.mxu0 %v236
    %240 = vmatprep.subr.mxu0 0.0
    %241 = vmatpush1.xpose.msra.mxu0 %v233
    %242 = vmatprep.subr.mxu0 0.0
    %243 = vmatpush1.xpose.msra.mxu0 %v230
    %244 = vmatprep.subr.mxu0 0.0
    %245 = vmatpush1.xpose.msra.mxu0 %v227
    %246 = vmatprep.subr.mxu0 0.0
    %247 = vmatpush1.xpose.msra.mxu0 %v224
    %248 = vmatprep.subr.mxu0 0.0
    %249 = vmatpush1.xpose.msra.mxu0 %v221
    %250 = vmatprep.subr.mxu0 0.0
    %251 = vmatpush1.xpose.msra.mxu0 %v218
    %252 = vmatprep.subr.mxu0 0.0
    %253 = vmatpush1.xpose.msra.mxu0 %v215
    %254 = vmatprep.subr.mxu0 0.0
    %255 = vmatpush1.xpose.msra.mxu0 %v212
    %256 = vmatprep.subr.mxu0 0.0
    %257 = vmatpush1.xpose.msra.mxu0 %v209
    %258 = vmatprep.subr.mxu0 0.0
    %259 = vmatpush1.xpose.msra.mxu0 %v206
    %260 = vmatprep.subr.mxu0 0.0
    %261 = vmatpush1.xpose.msra.mxu0 %v203
    %262 = vmatprep.subr.mxu0 0.0
    %263 = vmatpush1.xpose.msra.mxu0 %v200
    %264 = vmatprep.subr.mxu0 0.0
    %265 = vmatpush1.xpose.msra.mxu0 %v197
    %266 = vmatprep.subr.mxu0 0.0
    %267 = vmatpush1.xpose.msra.mxu0 %v194
    %268 = vmatprep.subr.mxu0 0.0
    %269 = vmatpush1.xpose.msra.mxu0 %v191
    %270 = vmatprep.subr.mxu0 0.0
    %271 = vmatpush2.xpose.msra.mxu0 0.0
    %272 = vmatprep.subr.mxu0 0.0
    %273 = vmatpush2.xpose.msra.mxu0 0.0
    %274 = vmatprep.subr.mxu0 0.0
    %275 = vmatpush2.xpose.msra.mxu0 0.0
    %276 = vmatprep.subr.mxu0 0.0
    %277 = vmatpush2.xpose.msra.mxu0 0.0
    %278 = vmatprep.subr.mxu0 0.0
    %279 = vmatpush2.xpose.msra.mxu0 0.0
    %280 = vmatprep.subr.mxu0 0.0
    %281 = vmatpush2.xpose.msra.mxu0 0.0
    %282 = vmatprep.subr.mxu0 0.0
    %283 = vmatpush2.xpose.msra.mxu0 0.0
    %284 = vmatprep.subr.mxu0 0.0
    %285 = vmatpush2.xpose.msra.mxu0 0.0
    %286 = vmatprep.subr.mxu0 0.0
    %287 = vmatpush2.xpose.msra.mxu0 0.0
    %288 = vmatprep.subr.mxu0 0.0
    %289 = vmatpush2.xpose.msra.mxu0 0.0
    %290 = vmatprep.subr.mxu0 0.0
    %291 = vmatpush2.xpose.msra.mxu0 0.0
    %292 = vmatprep.subr.mxu0 0.0
    %293 = vmatpush2.xpose.msra.mxu0 0.0
    %294 = vmatprep.subr.mxu0 0.0
    %295 = vmatpush2.xpose.msra.mxu0 0.0
    %296 = vmatprep.subr.mxu0 0.0
    %297 = vmatpush2.xpose.msra.mxu0 0.0
    %298 = vmatprep.subr.mxu0 0.0
    %299 = vmatpush2.xpose.msra.mxu0 0.0
    %300 = vmatprep.subr.mxu0 0.0
    %301 = vmatpush2.xpose.msra.mxu0 0.0
    %302 = vmatprep.mubr.f32.mxu0 0.0
    %303 = vmatmul.mubr.f32.gmra.mxu0 %v44
    %v304 = vpop.f32.mrf.mxu0
    %v305 = vadd.f32 0.0, %v304
    %v306 = vpop.f32.mrf.mxu0
    %307 = vdwg.mxu0
    %v308 = vmul.f32 %v305, %v26
    %s309 = scalar_lea.vmem %s3, 1
    %v310 = vld [vmem:[%s309] sm:$0x1]
    %v312 = vlaneseq
    %v313 = vshrl.u32 %v312, 7
    %v314 = vsub.s32 0, %v313
    %v315 = vrot.slane %v310, %v314
    %v317 = vmul.f32 %v308, %v315
    %v318 = vmax.f32 %v172, %v317
    %v319 = vsub.f32 %v172, %v318
    %v320 = vmul.f32 %v319, 1.442695
    %v321 = vpow.pop %v320
    %v322 = vsub.f32 %v317, %v318
    %v323 = vmul.f32 %v322, 1.442695
    %v324 = vpow.pop %v323
    %v325 = vmul.f32 %v321, %v172
    %v326 = vmul.f32 %v324, %v317
    %v327 = vadd.f32 %v325, %v326
    %v328 = vadd.f32 %v321, %v324
    %v329 = vrcp.pop %v328
    %v330 = vmul.f32 %v327, %v329
    %331 = vst [vmem:[#allocation3] sm:$0xff] %v330
    // Predicated region
    $region18: #{tpu_custom_call.1} parent=1 // pred_check
      _
    $region19: #{tpu_custom_call.1} parent=1 // pred_check_branch
      %333 = sbr.rel (0) target = $region21
    $region20: #{tpu_custom_call.1} parent=1 // pred_region
      %s335 = ssub.s32 128, 128
      %336 = vsyncadd [#allocation4], %s335
      %s338 = sshll.u32 [#allocation3], 4
      %s339 = int_to_ptr.vmem [resolvable:$true] %s338
      %341 = dma.vmem_to_hbm [thread:$0]  %s339, 128, %s4, [#allocation4]
    $region21: #{tpu_custom_call.1} parent=1 // pred_fallthru
      _
    // Predicated region
    $region22: #{tpu_custom_call.1} parent=1 // pred_check
      _
    $region23: #{tpu_custom_call.1} parent=1 // pred_check_branch
      %343 = sbr.rel (0) target = $region25
    $region24: #{tpu_custom_call.1} parent=1 // pred_region
      %344 = dma.done [#allocation4], 128
    $region25: #{tpu_custom_call.1} parent=1 // pred_fallthru
      _
    %345 = vsyncpa [#allocation4], 1

</llo_original>
